<compile_context>
chip_gen: v6e
topology: v6e:2x2x1
jax: 0.10.0
libtpu: 0.0.40
codegen_flags: <defaults>
</compile_context>

<pallas_src>
import functools

import numpy as np
import jax
import jax.numpy as jnp
from jax.experimental import pallas as pl
from jax.experimental.pallas import tpu as pltpu


def _l1_reg_kernel(mask_ref, x_ref, out_ref, *, plane_pad: int, w: int,
                   bc: int, bc_tile: int, ragged: bool):
    # mask_ref: (1, plane_pad) f32 {0,1}  (keeps row < h-1 and col < w-1)
    # x_ref:    (bc_tile, plane_pad)      whole flattened planes
    # out_ref:  (1, 1, plane_pad)         per-block lane-dense partial sums
    x = x_ref[...].astype(jnp.float32)
    # Neighbour at +1 (next column) and +w (next row) of the flattened plane,
    # realized as XLU lane rotations; wrapped elements land on masked lanes.
    nxt_col = pltpu.roll(x, shift=plane_pad - 1, axis=1)   # x[..., (p + 1) % P]
    nxt_row = pltpu.roll(x, shift=plane_pad - w, axis=1)   # x[..., (p + w) % P]
    diff = jnp.abs(x - nxt_row) + jnp.abs(x - nxt_col)

    keep = mask_ref[...] != jnp.float32(0.0)               # (1, plane_pad)
    if ragged:
        # Ragged last block: zero rows past bc (Pallas OOB reads are garbage).
        i = pl.program_id(0)
        row_ids = jax.lax.broadcasted_iota(jnp.int32, (bc_tile, plane_pad), 0)
        keep = jnp.logical_and(keep, row_ids < (bc - i * bc_tile))

    diff = jnp.where(keep, diff, jnp.float32(0.0))         # inf-safe masking
    out_ref[0] = jnp.sum(diff, axis=0, keepdims=True)      # sublane reduce only


def _round_up(x: int, m: int) -> int:
    return (x + m - 1) // m * m


def _l1_regularization_impl(image: jax.Array) -> jax.Array:
    """Matches torch: sum(|dx| + |dy|) / (b * (h - 1) * (w - 1))."""
    b, c, h, w = image.shape
    bc = b * c
    plane = h * w
    itemsize = jnp.dtype(image.dtype).itemsize

    x2d = image.reshape(bc, plane)  # free, contiguous reshape (no transpose)

    # Lane padding only when h*w is not a 128 multiple, to keep pltpu.roll on
    # the cheap full-vreg path.  The padded lanes are zero and always masked.
    plane_pad = max(128, _round_up(plane, 128))
    if plane_pad != plane:
        x2d = jnp.pad(x2d, ((0, 0), (0, plane_pad - plane)))

    # Block sizing by the actual dtype; ~4 MiB blocks, capped so triple-buffered
    # input blocks + in-kernel f32 temps stay well inside the 32 MiB scoped VMEM
    # (safe on v7x's smaller physical VMEM too).
    vmem_limit = 32 << 20
    target_block_bytes = min(4 << 20, vmem_limit // 8)
    rows_fit = max(8, (target_block_bytes // max(1, plane_pad * itemsize)) // 8 * 8)
    # TODO(synk): for planes so large that even an 8-row block blows the VMEM
    # budget, add a second grid axis tiling the lane dim with a 1-row halo.
    bc_tile = min(rows_fit, _round_up(bc, 8))
    bc_tile = max(8, (bc_tile // 8) * 8)
    num_blocks = -(-bc // bc_tile)
    # v7x megacore: prefer >=2 parallel blocks when the input allows it.
    while num_blocks < 2 and bc_tile >= 16:
        bc_tile = max(8, ((bc_tile // 2) + 7) // 8 * 8)
        num_blocks = -(-bc // bc_tile)
    ragged = (bc % bc_tile) != 0

    # Validity mask over the flattened plane: numpy constant, folded by jit.
    pos = np.arange(plane_pad, dtype=np.int64)
    valid = (pos < (h - 1) * w) & ((pos % w) < (w - 1))
    mask = jnp.asarray(valid.astype(np.float32).reshape(1, plane_pad))

    kernel = functools.partial(
        _l1_reg_kernel, plane_pad=plane_pad, w=w, bc=bc, bc_tile=bc_tile,
        ragged=ragged)

    cost = pl.CostEstimate(
        flops=6 * bc * plane_pad,
        transcendentals=0,
        bytes_accessed=bc * plane_pad * itemsize
        + (num_blocks + 1) * plane_pad * 4,
    )

    # Deeper input pipelining only when there are enough steps to use it.
    img_spec_kwargs = {}
    if num_blocks >= 3:
        img_spec_kwargs["pipeline_mode"] = pl.Buffered(3)

    partials = pl.pallas_call(
        kernel,
        out_shape=jax.ShapeDtypeStruct((num_blocks, 1, plane_pad), jnp.float32),
        grid_spec=pltpu.PrefetchScalarGridSpec(
            num_scalar_prefetch=0,
            grid=(num_blocks,),
            in_specs=[
                pl.BlockSpec((1, plane_pad), lambda i: (0, 0)),      # mask (resident)
                pl.BlockSpec((bc_tile, plane_pad), lambda i: (i, 0),  # image planes
                             **img_spec_kwargs),
            ],
            out_specs=pl.BlockSpec((1, 1, plane_pad), lambda i: (i, 0, 0)),
        ),
        compiler_params=pltpu.CompilerParams(
            dimension_semantics=("parallel",),   # independent blocks -> 2 TCs on v7x
            vmem_limit_bytes=vmem_limit,
        ),
        cost_estimate=cost,
    )(mask, x2d)

    denom = jnp.float32(b * (h - 1) * (w - 1))
    return (jnp.sum(partials) / denom).astype(jnp.float32)


# Single fused dispatch: mask constant, reshape, pallas_call, final reduce.
l1_regularization = jax.jit(_l1_regularization_impl)


if __name__ == "__main__":
    key = jax.random.PRNGKey(0)
    image = jax.random.normal(key, (2, 4, 16, 16), dtype=jnp.float32)

    out = jax.block_until_ready(l1_regularization(image))

    # Pure-JAX reference (same math as the torch module).
    b, _, h, w = image.shape
    base = image[:, :, 0:h - 1, 0:w - 1]
    ref = jnp.sum(
        jnp.abs(base - image[:, :, 1:, 0:w - 1])
        + jnp.abs(base - image[:, :, 0:h - 1, 1:])
    ) / (b * (h - 1) * (w - 1))
    assert jnp.allclose(out, ref, rtol=1e-5, atol=1e-5), (out, ref)

    print("KERNEL_OK")
</pallas_src>

<mosaic_0001>
module attributes {stable_mosaic.version = 11 : i64} {
  func.func @_l1_reg_kernel(%arg0: i32, %arg1: memref<1x256xf32, #tpu.memory_space<vmem>>, %arg2: memref<8x256xf32, #tpu.memory_space<vmem>>, %arg3: memref<1x1x256xf32, #tpu.memory_space<vmem>>) attributes {dimension_semantics = [#tpu.dimension_semantics<parallel>], iteration_bounds = array<i64: 1>, scalar_prefetch = 0 : i64, scratch_operands = 0 : i64, tpu.core_type = #tpu.core_type<tc>, window_params = [{pipeline_mode = #tpu.pipeline_mode<synchronous>, transform_indices = @transform_0, window_bounds = array<i64: 1, 256>}, {transform_indices = @transform_1, window_bounds = array<i64: 8, 256>}, {transform_indices = @transform_2, window_bounds = array<i64: 1, 1, 256>}]} {
    %c0 = arith.constant 0 : index
    %c0_0 = arith.constant 0 : index
    %0 = vector.load %arg2[%c0, %c0_0] : memref<8x256xf32, #tpu.memory_space<vmem>>, vector<8x256xf32>
    %c255_i32 = arith.constant 255 : i32
    %1 = tpu.dynamic_rotate %0 by %c255_i32 dim 1 : vector<8x256xf32>, i32 -> vector<8x256xf32>
    %c240_i32 = arith.constant 240 : i32
    %2 = tpu.dynamic_rotate %0 by %c240_i32 dim 1 : vector<8x256xf32>, i32 -> vector<8x256xf32>
    %3 = arith.subf %0, %2 : vector<8x256xf32>
    %4 = math.absf %3 : vector<8x256xf32>
    %5 = arith.subf %0, %1 : vector<8x256xf32>
    %6 = math.absf %5 : vector<8x256xf32>
    %7 = arith.addf %4, %6 : vector<8x256xf32>
    %c0_1 = arith.constant 0 : index
    %c0_2 = arith.constant 0 : index
    %8 = vector.load %arg1[%c0_1, %c0_2] : memref<1x256xf32, #tpu.memory_space<vmem>>, vector<1x256xf32>
    %cst = arith.constant 0.000000e+00 : f32
    %9 = vector.broadcast %cst : f32 to vector<1x256xf32>
    %10 = arith.cmpf one, %8, %9 : vector<1x256xf32>
    %cst_3 = arith.constant 0.000000e+00 : f32
    %11 = vector.shape_cast %10 : vector<1x256xi1> to vector<1x256xi1>
    %12 = vector.broadcast %11 : vector<1x256xi1> to vector<8x256xi1>
    %13 = vector.broadcast %cst_3 : f32 to vector<8x256xf32>
    %14 = arith.select %12, %7, %13 : vector<8x256xi1>, vector<8x256xf32>
    %cst_4 = arith.constant dense<0.000000e+00> : vector<256xf32>
    %15 = vector.multi_reduction <add>, %14, %cst_4 [0] : vector<8x256xf32> to vector<256xf32>
    %16 = vector.shape_cast %15 : vector<256xf32> to vector<1x256xf32>
    %c0_5 = arith.constant 0 : index
    %c0_6 = arith.constant 0 : index
    %c0_7 = arith.constant 0 : index
    %17 = vector.load %arg3[%c0_5, %c0_6, %c0_7] : memref<1x1x256xf32, #tpu.memory_space<vmem>>, vector<1x1x256xf32>
    %18 = vector.shape_cast %17 : vector<1x1x256xf32> to vector<1x256xf32>
    %19 = vector.shape_cast %16 : vector<1x256xf32> to vector<1x1x256xf32>
    tpu.vector_store %arg3[%c0_5, %c0_6, %c0_7], %19 {strides = array<i32>} : memref<1x1x256xf32, #tpu.memory_space<vmem>>, vector<1x1x256xf32>,
    return
  }
  func.func @transform_0(%arg0: i32) -> (i32, i32) {
    %c0_i32 = arith.constant 0 : i32
    %c0_i32_0 = arith.constant 0 : i32
    %c0_i32_1 = arith.constant 0 : i32
    return %c0_i32, %c0_i32_0 : i32, i32
  }
  func.func @transform_1(%arg0: i32) -> (i32, i32) {
    %c0_i32 = arith.constant 0 : i32
    %c0_i32_0 = arith.constant 0 : i32
    return %arg0, %c0_i32 : i32, i32
  }
  func.func @transform_2(%arg0: i32) -> (i32, i32, i32) {
    %c0_i32 = arith.constant 0 : i32
    %c0_i32_0 = arith.constant 0 : i32
    %c0_i32_1 = arith.constant 0 : i32
    return %arg0, %c0_i32, %c0_i32_0 : i32, i32, i32
  }
}

</mosaic_0001>

<llo_original>
// kernel: _l1_regularization_impl.1
$region0: #{_l1_regularization_impl.1}
  #allocation0 [shape = 'u32[]', space=smem, size = 0x4, offset = 0x4, fixed_abs, tag = 'smem constant byte address 0x4 - core index']
  #allocation1 [shape = 'u32[144,128]{1,0:T(1,128)}', space=vmem, size = 0x12000, scoped, tag = 'internal scratch']
  %s0 = inlined_call_operand.vmem [shape: f32[1,256], index: 0, kind: input, shape index: {}]
  %s1 = inlined_call_operand.vmem [shape: f32[8,256], index: 1, kind: input, shape index: {}]
  %s2 = inlined_call_operand.vmem [shape: f32[1,1,256], index: 2, kind: output, shape index: {}]
  %s3 = sld [smem:[#allocation0]]
  $region18: #{_l1_regularization_impl.1} parent=0
    _
  %s5 = ssub.s32 1, %s3
  %s6 = scalar_select 0, %s5, %s3
  // Predicated region
  $region2: #{_l1_regularization_impl.1} parent=0 // pred_check
    _
  $region3: #{_l1_regularization_impl.1} parent=0 // pred_check_branch
    %8 = sbr.rel (0) target = $region5
  $region4: #{_l1_regularization_impl.1} parent=0 // pred_region
    _
  $region5: #{_l1_regularization_impl.1} parent=0 // pred_fallthru
    _
  // Predicated region
  $region6: #{_l1_regularization_impl.1} parent=0 // pred_check
    _
  $region7: #{_l1_regularization_impl.1} parent=0 // pred_check_branch
    %10 = sbr.rel (0) target = $region9
  $region8: #{_l1_regularization_impl.1} parent=0 // pred_region
    _
  $region9: #{_l1_regularization_impl.1} parent=0 // pred_fallthru
    _
  %v11 = vld [vmem:[%s1] sm:$0xff]
  %v12 = vld [vmem:[%s1 + $0x8] sm:$0xff]
  %13 = vrot.lane.b32.xlu0 %v11, 127
  %v14 = vpop.permute.xlu0 %13
  %15 = vrot.lane.b32.xlu0 %v12, 127
  %v16 = vpop.permute.xlu0 %15
  %v17 = vlaneseq
  %v18 = vand.u32 %v17, 127
  %vm19 = vcmp.lt.s32.totalorder %v18, 127
  %v20 = vsel %vm19, %v14, %v16
  %v21 = vsel %vm19, %v16, %v14
  %22 = vrot.lane.b32.xlu0 %v11, 112
  %v23 = vpop.permute.xlu0 %22
  %24 = vrot.lane.b32.xlu0 %v12, 112
  %v25 = vpop.permute.xlu0 %24
  %vm26 = vcmp.lt.s32.totalorder %v18, 112
  %v27 = vsel %vm26, %v23, %v25
  %v28 = vsel %vm26, %v25, %v23
  %v29 = vsub.f32 %v11, %v27
  %v30 = vsub.f32 %v12, %v28
  %v31 = vand.u32 2147483647, %v29
  %v32 = vand.u32 2147483647, %v30
  %v33 = vsub.f32 %v11, %v20
  %v34 = vsub.f32 %v12, %v21
  %v35 = vand.u32 2147483647, %v33
  %v36 = vand.u32 2147483647, %v34
  %v37 = vadd.f32 %v31, %v35
  %v38 = vadd.f32 %v32, %v36
  %v39 = vld [vmem:[%s0] sm:$0x3]
  %vm40 = vcmp.ne.f32.partialorder %v39, 0.0
  %v41 = vsel %vm40, 1, 0
  %v42 = vlaneseq
  %v43 = vshrl.u32 %v42, 7
  %v44 = vsub.s32 0, %v43
  %v45 = vrot.slane %v41, %v44
  %v46 = vlaneseq
  %v47 = vshrl.u32 %v46, 7
  %v48 = vsub.s32 1, %v47
  %v49 = vrot.slane %v41, %v48
  %vm50 = vcmp.eq.s32.totalorder %v45, 1
  %vm51 = vcmp.eq.s32.totalorder %v49, 1
  %v52 = vsel %vm50, %v37, 0.0
  %v53 = vsel %vm51, %v38, 0.0
  %v54 = vrot.slane %v52, 4
  %v55 = vadd.f32 %v52, %v54
  %v56 = vrot.slane %v55, 2
  %v57 = vadd.f32 %v55, %v56
  %v58 = vrot.slane %v57, 1
  %v59 = vadd.f32 %v57, %v58
  %v60 = vrot.slane %v53, 4
  %v61 = vadd.f32 %v53, %v60
  %v62 = vrot.slane %v61, 2
  %v63 = vadd.f32 %v61, %v62
  %v64 = vrot.slane %v63, 1
  %v65 = vadd.f32 %v63, %v64
  %v68 = vcombine.low %v59, %v65
  %v70 = vunpack.c.l.s4 1966171168
  %v71 = vunpack.c.0.s8 %v70
  %v72 = vlaneseq
  %v73 = vshrl.u32 %v72, 7
  %v74 = vsub.s32 %v71, %v73
  %v75 = vrot.slane %v68, %v74
  %v77 = vunpack.c.l.s4 1966171168
  %v78 = vunpack.c.0.s8 %v77
  %v79 = vlaneseq
  %v80 = vshrl.u32 %v79, 7
  %v81 = vsub.s32 %v78, %v80
  %v82 = vrot.slane %v75, %v81
  %v84 = vlaneseq
  %vm85 = vcmp.ge.s32.totalorder %v84, 0
  %vm86 = vcmp.lt.s32.totalorder %v84, 256
  %vm87 = vmand %vm85, %vm86
  %88 = vst.msk [vmem:[%s2] sm:$0x3] %vm87, %v82
  // Predicated region
  $region10: #{_l1_regularization_impl.1} parent=0 // pred_check
    _
  $region11: #{_l1_regularization_impl.1} parent=0 // pred_check_branch
    %90 = sbr.rel (0) target = $region13
  $region12: #{_l1_regularization_impl.1} parent=0 // pred_region
    _
  $region13: #{_l1_regularization_impl.1} parent=0 // pred_fallthru
    _
  // Predicated region
  $region14: #{_l1_regularization_impl.1} parent=0 // pred_check
    _
  $region15: #{_l1_regularization_impl.1} parent=0 // pred_check_branch
    %92 = sbr.rel (0) target = $region17
  $region16: #{_l1_regularization_impl.1} parent=0 // pred_region
    _
  $region17: #{_l1_regularization_impl.1} parent=0 // pred_fallthru
    _

</llo_original>
